<compile_context>
chip_gen: v5e
topology: v5e:2x2
jax: 0.10.0
libtpu: 0.0.40
codegen_flags: <defaults>
</compile_context>

<pallas_src>
import math
import functools

import jax
import jax.numpy as jnp
from jax.experimental import pallas as pl
from jax.experimental.pallas import tpu as pltpu


def _token_embedding_kernel(x3_ref, w_ref, b_ref, o_ref):
    # x3_ref: (TR, 3C)   w_ref: (3C, Dp)   b_ref: (1, Dp) f32   o_ref: (TR, Dp)
    acc = jnp.dot(x3_ref[...], w_ref[...], preferred_element_type=jnp.float32)
    o_ref[...] = (acc + b_ref[...]).astype(o_ref.dtype)


def _choose_row_tile(n_rows, d_pad, *, preferred, out_bytes,
                     out_tile_budget=16 * 1024 * 1024, min_grid_steps=2):
    """Row tile (multiple of 8) bounded by a VMEM budget for the double-buffered
    output tile, by `preferred`, and clamped so the grid has >= min_grid_steps
    steps when enough rows exist (v7x megacore sharding)."""
    cap = out_tile_budget // (2 * d_pad * out_bytes)
    cap = max(8, (cap // 8) * 8)
    tr = min(preferred, cap)
    tr = max(8, (tr // 8) * 8)
    # Ensure at least `min_grid_steps` grid steps when there are enough rows.
    if n_rows >= min_grid_steps * 8:
        max_tr_for_steps = max(8, (n_rows // min_grid_steps // 8) * 8)
        tr = min(tr, max_tr_for_steps)
    # Never exceed the (row-padded) problem size.
    tr = min(tr, max(8, ((n_rows + 7) // 8) * 8))
    return tr


@functools.partial(
    jax.jit,
    static_argnames=("compute_dtype", "out_dtype", "row_tile",
                     "keep_padded_d_model"))
def token_embedding(x, weight, bias, *, compute_dtype=jnp.float32,
                    out_dtype=jnp.float32, row_tile=2048,
                    keep_padded_d_model=False):
    """Informer TokenEmbedding forward.

    x      : (B, L, C)  channels-last input
    weight : (D, C, 3)  torch Conv1d weight layout
    bias   : (D,)
    returns: (B, L, D) in `out_dtype` (or (B, L, Dp) if keep_padded_d_model).
    """
    B, L, C = x.shape
    D = weight.shape[0]
    threeC = 3 * C
    Dp = ((D + 127) // 128) * 128  # lane-dense output width

    # Fused-tap weight: (D, C, 3) -> (3, C, D) -> (3C, D); row order matches
    # the [prev | center | next] channel concatenation below.
    w_flat = jnp.transpose(weight, (2, 1, 0)).reshape(threeC, D)
    b_row = bias.reshape(1, D).astype(jnp.float32)
    if Dp != D:
        w_flat = jnp.pad(w_flat, ((0, 0), (0, Dp - D)))
        b_row = jnp.pad(b_row, ((0, 0), (0, Dp - D)))
    w_flat = w_flat.astype(compute_dtype)

    # Cast BEFORE the halo so the materialized (N, 3C) temporary is in
    # compute_dtype (halves wrapper-side traffic when bf16 is selected).
    xc = x.astype(compute_dtype)
    x3 = jnp.concatenate(
        [jnp.roll(xc, 1, axis=1), xc, jnp.roll(xc, -1, axis=1)], axis=-1)

    N = B * L
    x3 = x3.reshape(N, threeC)

    in_bytes = jnp.dtype(compute_dtype).itemsize
    out_bytes = jnp.dtype(out_dtype).itemsize
    TR = _choose_row_tile(N, Dp, preferred=row_tile, out_bytes=out_bytes)

    # Pad rows up to a multiple of TR (keeps pipelining / megacore sharding
    # and bounded VMEM for arbitrary N — no single-giant-block fallback).
    Np = ((N + TR - 1) // TR) * TR
    if Np != N:
        x3 = jnp.pad(x3, ((0, Np - N), (0, 0)))
    grid = (Np // TR,)

    cost = pl.CostEstimate(
        flops=2 * Np * threeC * Dp,
        transcendentals=0,
        bytes_accessed=Np * (threeC * in_bytes + Dp * out_bytes)
        + threeC * Dp * in_bytes + Dp * 4,
    )

    out = pl.pallas_call(
        _token_embedding_kernel,
        out_shape=jax.ShapeDtypeStruct((Np, Dp), out_dtype),
        grid_spec=pltpu.PrefetchScalarGridSpec(
            num_scalar_prefetch=0,
            grid=grid,
            in_specs=[
                pl.BlockSpec((TR, threeC), lambda i: (i, 0)),
                pl.BlockSpec((threeC, Dp), lambda i: (0, 0)),
                pl.BlockSpec((1, Dp), lambda i: (0, 0)),
            ],
            out_specs=pl.BlockSpec((TR, Dp), lambda i: (i, 0)),
        ),
        compiler_params=pltpu.CompilerParams(
            dimension_semantics=("parallel",),
            vmem_limit_bytes=32 * 1024 * 1024,
        ),
        cost_estimate=cost,
    )(x3, w_flat, b_row)

    if keep_padded_d_model:
        # Caller fuses the [:, :D] slice downstream (avoids an extra pass over
        # the dominant output tensor when D is not a multiple of 128).
        return out[:N].reshape(B, L, Dp)
    return out[:N, :D].reshape(B, L, D)


def _init_params(key, c_in, d_model):
    """Deterministic init matching nn.Conv1d + kaiming_normal_(fan_in, leaky_relu)."""
    k_w, k_b = jax.random.split(key)
    fan_in = c_in * 3
    gain = math.sqrt(2.0 / (1.0 + 0.01 ** 2))          # leaky_relu gain (a=0.01)
    std = gain / math.sqrt(fan_in)
    weight = std * jax.random.normal(k_w, (d_model, c_in, 3), dtype=jnp.float32)
    bound = 1.0 / math.sqrt(fan_in)                    # default Conv1d bias init
    bias = jax.random.uniform(k_b, (d_model,), minval=-bound, maxval=bound,
                              dtype=jnp.float32)
    return weight, bias


def _reference(x, weight, bias):
    """Pure-JAX reference of the circular conv (for verification)."""
    w_tcd = jnp.transpose(weight, (2, 1, 0))  # (3, C, D)
    x_prev = jnp.roll(x, 1, axis=1)
    x_next = jnp.roll(x, -1, axis=1)
    y = (jnp.einsum("blc,cd->bld", x_prev, w_tcd[0])
         + jnp.einsum("blc,cd->bld", x, w_tcd[1])
         + jnp.einsum("blc,cd->bld", x_next, w_tcd[2]))
    return y + bias[None, None, :]


if __name__ == "__main__":
    B, L, C_IN, D_MODEL = 2, 8, 4, 32

    key = jax.random.PRNGKey(0)
    k_x, k_p = jax.random.split(key)
    x = jax.random.normal(k_x, (B, L, C_IN), dtype=jnp.float32)
    weight, bias = _init_params(k_p, C_IN, D_MODEL)

    ref = _reference(x, weight, bias)

    # f32 path (multi-step grid: N=16 rows -> TR=8, 2 grid steps).
    out = jax.block_until_ready(token_embedding(x, weight, bias))
    assert out.shape == (B, L, D_MODEL)
    assert jnp.allclose(out, ref, atol=1e-5, rtol=1e-5), "f32 mismatch vs reference"

    # bf16 operands + bf16 output (f32 MXU accumulation) — halves HBM traffic.
    out_bf16 = jax.block_until_ready(
        token_embedding(x, weight, bias,
                        compute_dtype=jnp.bfloat16, out_dtype=jnp.bfloat16))
    assert out_bf16.shape == (B, L, D_MODEL)
    assert out_bf16.dtype == jnp.bfloat16
    assert jnp.allclose(out_bf16.astype(jnp.float32), ref, atol=1e-1, rtol=1e-1), \
        "bf16 mismatch vs reference"

    # Awkward row count (B*L = 14): exercises the pad-N fallback path.
    x_odd = jax.random.normal(k_x, (2, 7, C_IN), dtype=jnp.float32)
    ref_odd = _reference(x_odd, weight, bias)
    out_odd = jax.block_until_ready(token_embedding(x_odd, weight, bias))
    assert out_odd.shape == (2, 7, D_MODEL)
    assert jnp.allclose(out_odd, ref_odd, atol=1e-5, rtol=1e-5), "padded-N mismatch"

    print("KERNEL_OK")
</pallas_src>

<mosaic_0001>
module attributes {stable_mosaic.version = 11 : i64} {
  func.func @_token_embedding_kernel(%arg0: i32, %arg1: memref<8x12xf32, #tpu.memory_space<vmem>>, %arg2: memref<12x128xf32, #tpu.memory_space<vmem>>, %arg3: memref<1x128xf32, #tpu.memory_space<vmem>>, %arg4: memref<8x128xf32, #tpu.memory_space<vmem>>) attributes {dimension_semantics = [#tpu.dimension_semantics<parallel>], iteration_bounds = array<i64: 2>, scalar_prefetch = 0 : i64, scratch_operands = 0 : i64, tpu.core_type = #tpu.core_type<tc>, window_params = [{transform_indices = @transform_0, window_bounds = array<i64: 8, 12>}, {pipeline_mode = #tpu.pipeline_mode<synchronous>, transform_indices = @transform_1, window_bounds = array<i64: 12, 128>}, {pipeline_mode = #tpu.pipeline_mode<synchronous>, transform_indices = @transform_2, window_bounds = array<i64: 1, 128>}, {transform_indices = @transform_3, window_bounds = array<i64: 8, 128>}]} {
    %c0 = arith.constant 0 : index
    %c0_0 = arith.constant 0 : index
    %0 = vector.load %arg1[%c0, %c0_0] : memref<8x12xf32, #tpu.memory_space<vmem>>, vector<8x12xf32>
    %c0_1 = arith.constant 0 : index
    %c0_2 = arith.constant 0 : index
    %1 = vector.load %arg2[%c0_1, %c0_2] : memref<12x128xf32, #tpu.memory_space<vmem>>, vector<12x128xf32>
    %cst = arith.constant dense<0.000000e+00> : vector<8x128xf32>
    %2 = tpu.matmul %0, %1, %cst {dimension_numbers = #tpu.dot_dimension_numbers<[1], [0], [0], [1], [0, 0, 1, 1], [], []>} : vector<8x12xf32>, vector<12x128xf32>, vector<8x128xf32> -> vector<8x128xf32>
    %c0_3 = arith.constant 0 : index
    %c0_4 = arith.constant 0 : index
    %3 = vector.load %arg3[%c0_3, %c0_4] : memref<1x128xf32, #tpu.memory_space<vmem>>, vector<1x128xf32>
    %4 = vector.broadcast %3 : vector<1x128xf32> to vector<8x128xf32>
    %5 = arith.addf %2, %4 : vector<8x128xf32>
    %c0_5 = arith.constant 0 : index
    %c0_6 = arith.constant 0 : index
    %6 = vector.load %arg4[%c0_5, %c0_6] : memref<8x128xf32, #tpu.memory_space<vmem>>, vector<8x128xf32>
    tpu.vector_store %arg4[%c0_5, %c0_6], %5 {strides = array<i32>} : memref<8x128xf32, #tpu.memory_space<vmem>>, vector<8x128xf32>,
    return
  }
  func.func @transform_0(%arg0: i32) -> (i32, i32) {
    %c0_i32 = arith.constant 0 : i32
    %c0_i32_0 = arith.constant 0 : i32
    return %arg0, %c0_i32 : i32, i32
  }
  func.func @transform_1(%arg0: i32) -> (i32, i32) {
    %c0_i32 = arith.constant 0 : i32
    %c0_i32_0 = arith.constant 0 : i32
    %c0_i32_1 = arith.constant 0 : i32
    return %c0_i32, %c0_i32_0 : i32, i32
  }
  func.func @transform_2(%arg0: i32) -> (i32, i32) {
    %c0_i32 = arith.constant 0 : i32
    %c0_i32_0 = arith.constant 0 : i32
    %c0_i32_1 = arith.constant 0 : i32
    return %c0_i32, %c0_i32_0 : i32, i32
  }
  func.func @transform_3(%arg0: i32) -> (i32, i32) {
    %c0_i32 = arith.constant 0 : i32
    %c0_i32_0 = arith.constant 0 : i32
    return %arg0, %c0_i32 : i32, i32
  }
}

</mosaic_0001>

<llo_original>
// kernel: token_embedding.1
$region0: #{token_embedding.1}
  #allocation0 [shape = 'u32[]', space=smem, size = 0x4, offset = 0x4, fixed_abs, tag = 'smem constant byte address 0x4 - core index']
  #allocation1 [shape = 'u32[72,128]{1,0:T(1,128)}', space=vmem, size = 0x9000, scoped, tag = 'internal scratch']
  %s0 = inlined_call_operand.vmem [shape: f32[16,12], index: 0, kind: input, shape index: {}]
  %s1 = inlined_call_operand.vmem [shape: f32[12,128], index: 1, kind: input, shape index: {}]
  %s2 = inlined_call_operand.vmem [shape: f32[1,128], index: 2, kind: input, shape index: {}]
  %s3 = inlined_call_operand.vmem [shape: f32[16,128], index: 3, kind: output, shape index: {}]
  %s4 = sld [smem:[#allocation0]]
  $region45: #{token_embedding.1} parent=0
    _
  %s6 = ssub.s32 1, %s4
  %s7 = scalar_select 0, %s6, %s4
  loop: start=0, step=1, limit=4
  $region2: #{token_embedding.1} parent=0 // loop_pre_header
    _
  $region3: #{token_embedding.1} parent=0 // loop_header
    %s9 = sphi 0, %s13
    %p10 = scmp.ge.s32.totalorder %s9, 4
    %s19 = sphi 0, %s21
    %s22 = sphi 0, %s19
    %s23 = sphi 0, %s22
    %s39 = sphi 0, %s23
    %s43 = sphi 0, %s43
    %s45 = sphi 0, %s43
    %s46 = sphi 0, %s45
    %s60 = sphi 0, %s46
    %s64 = sphi 0, %s64
    %s66 = sphi 0, %s64
    %s67 = sphi 0, %s66
    %s81 = sphi 0, %s67
    %s87 = sphi 0, %s89
    %s90 = sphi 0, %s87
    %s91 = sphi 0, %s90
    %s107 = sphi 0, %s91
  $region4: #{token_embedding.1} parent=0 // loop_header_branch
    %12 = sbr.rel (%p10) target = $region8
  $region5: #{token_embedding.1} parent=0 // loop_body
    %s14 = ssub.s32 %s9, 1
    %s15 = ssub.s32 %s9, 2
    %s16 = sadd.s32 %s9, 1
    %s17 = ssub.s32 %s9, %s16
    %p18 = scmp.eq.s32.totalorder %s17, 0
    %s20 = sadd.s32 %s19, 1
    %s21 = scalar_select %p18, %s19, %s20
    %p24 = pneg %p18
    %p25 = scmp.eq.s32.totalorder %s9, 1
    %p26 = por %p24, %p25
    %p27 = scmp.ne.s32.totalorder %s19, %s22
    %p28 = scmp.eq.s32.totalorder %s9, 0
    %p29 = por %p27, %p28
    %p30 = scmp.ne.s32.totalorder %s19, %s22
    %p31 = scmp.eq.s32.totalorder %s14, 1
    %p32 = por %p30, %p31
    %p33 = scmp.ne.s32.totalorder %s22, %s23
    %p34 = scmp.eq.s32.totalorder %s14, 0
    %p35 = por %p33, %p34
    %p36 = scmp.ne.s32.totalorder %s22, %s23
    %p37 = scmp.eq.s32.totalorder %s15, 1
    %p38 = por %p36, %p37
    %p40 = scmp.ne.s32.totalorder %s23, %s39
    %p41 = scmp.eq.s32.totalorder %s15, 0
    %p42 = por %p40, %p41
    %s44 = sadd.s32 %s43, 1
    %p47 = scmp.eq.s32.totalorder %s9, 1
    %p48 = scmp.ne.s32.totalorder %s43, %s45
    %p49 = scmp.eq.s32.totalorder %s9, 0
    %p50 = por %p48, %p49
    %p51 = scmp.ne.s32.totalorder %s43, %s45
    %p52 = scmp.eq.s32.totalorder %s14, 1
    %p53 = por %p51, %p52
    %p54 = scmp.ne.s32.totalorder %s45, %s46
    %p55 = scmp.eq.s32.totalorder %s14, 0
    %p56 = por %p54, %p55
    %p57 = scmp.ne.s32.totalorder %s45, %s46
    %p58 = scmp.eq.s32.totalorder %s15, 1
    %p59 = por %p57, %p58
    %p61 = scmp.ne.s32.totalorder %s46, %s60
    %p62 = scmp.eq.s32.totalorder %s15, 0
    %p63 = por %p61, %p62
    %s65 = sadd.s32 %s64, 1
    %p68 = scmp.eq.s32.totalorder %s9, 1
    %p69 = scmp.ne.s32.totalorder %s64, %s66
    %p70 = scmp.eq.s32.totalorder %s9, 0
    %p71 = por %p69, %p70
    %p72 = scmp.ne.s32.totalorder %s64, %s66
    %p73 = scmp.eq.s32.totalorder %s14, 1
    %p74 = por %p72, %p73
    %p75 = scmp.ne.s32.totalorder %s66, %s67
    %p76 = scmp.eq.s32.totalorder %s14, 0
    %p77 = por %p75, %p76
    %p78 = scmp.ne.s32.totalorder %s66, %s67
    %p79 = scmp.eq.s32.totalorder %s15, 1
    %p80 = por %p78, %p79
    %p82 = scmp.ne.s32.totalorder %s67, %s81
    %p83 = scmp.eq.s32.totalorder %s15, 0
    %p84 = por %p82, %p83
    %s85 = ssub.s32 %s9, %s16
    %p86 = scmp.eq.s32.totalorder %s85, 0
    %s88 = sadd.s32 %s87, 1
    %s89 = scalar_select %p86, %s87, %s88
    %p92 = pneg %p86
    %p93 = scmp.eq.s32.totalorder %s9, 1
    %p94 = por %p92, %p93
    %p95 = scmp.ne.s32.totalorder %s87, %s90
    %p96 = scmp.eq.s32.totalorder %s9, 0
    %p97 = por %p95, %p96
    %p98 = scmp.ne.s32.totalorder %s87, %s90
    %p99 = scmp.eq.s32.totalorder %s14, 1
    %p100 = por %p98, %p99
    %p101 = scmp.ne.s32.totalorder %s90, %s91
    %p102 = scmp.eq.s32.totalorder %s14, 0
    %p103 = por %p101, %p102
    %p104 = scmp.ne.s32.totalorder %s90, %s91
    %p105 = scmp.eq.s32.totalorder %s15, 1
    %p106 = por %p104, %p105
    %p108 = scmp.ne.s32.totalorder %s91, %s107
    %p109 = scmp.eq.s32.totalorder %s15, 0
    %p110 = por %p108, %p109
    %p111 = scmp.le.s32.totalorder 1, %s9
    %p112 = scmp.lt.s32.totalorder %s9, 3
    %p113 = pnand %p111, %p112
    %p114 = pneg %p113
    // Predicated region
    $region9: #{token_embedding.1} parent=5 // pred_check
      _
    $region10: #{token_embedding.1} parent=5 // pred_check_branch
      %116 = sbr.rel (%p113) target = $region12
    $region11: #{token_embedding.1} parent=5 // pred_region
      %s117 = ssub.s32 %s9, 1
      // Predicated region
      $region13: #{token_embedding.1} parent=11 // pred_check
        %p118 = pneg %p56
      $region14: #{token_embedding.1} parent=11 // pred_check_branch
        %120 = sbr.rel (%p118) target = $region16
      $region15: #{token_embedding.1} parent=11 // pred_region
        _
      $region16: #{token_embedding.1} parent=11 // pred_fallthru
        _
      // Predicated region
      $region17: #{token_embedding.1} parent=11 // pred_check
        %p121 = pneg %p77
      $region18: #{token_embedding.1} parent=11 // pred_check_branch
        %123 = sbr.rel (%p121) target = $region20
      $region19: #{token_embedding.1} parent=11 // pred_region
        _
      $region20: #{token_embedding.1} parent=11 // pred_fallthru
        _
    $region12: #{token_embedding.1} parent=5 // pred_fallthru
      _
    %p124 = scmp.lt.s32.totalorder %s9, 2
    // Predicated region
    $region21: #{token_embedding.1} parent=5 // pred_check
      %p125 = pneg %p124
    $region22: #{token_embedding.1} parent=5 // pred_check_branch
      %127 = sbr.rel (%p125) target = $region24
    $region23: #{token_embedding.1} parent=5 // pred_region
      // Predicated region
      $region25: #{token_embedding.1} parent=23 // pred_check
        %p128 = pneg %p29
      $region26: #{token_embedding.1} parent=23 // pred_check_branch
        %130 = sbr.rel (%p128) target = $region28
      $region27: #{token_embedding.1} parent=23 // pred_region
        %p131 = scmp.lt.s32.totalorder %s9, 1
        %s132 = scalar_select %p131, %s9, 1
        %s133 = smul.addr %s132, 8
        %s134 = scalar_lea.vmem %s0, %s133
      $region28: #{token_embedding.1} parent=23 // pred_fallthru
        _
    $region24: #{token_embedding.1} parent=5 // pred_fallthru
      _
    %p135 = scmp.le.s32.totalorder 1, %s9
    %p136 = scmp.lt.s32.totalorder %s9, 3
    %p137 = pnand %p135, %p136
    %p138 = pneg %p137
    // Predicated region
    $region29: #{token_embedding.1} parent=5 // pred_check
      _
    $region30: #{token_embedding.1} parent=5 // pred_check_branch
      %140 = sbr.rel (%p137) target = $region32
    $region31: #{token_embedding.1} parent=5 // pred_region
      %s141 = ssub.s32 %s9, 1
      %p142 = scmp.lt.s32.totalorder %s14, 1
      %s143 = scalar_select %p142, %s14, 1
      %s144 = smul.addr %s143, 8
      %s145 = scalar_lea.vmem %s0, %s144
      %p146 = pneg %p35
      %p147 = pneg %p32
      %p148 = pneg %p56
      %p149 = pneg %p53
      %p150 = pneg %p77
      %p151 = pneg %p74
      %p152 = pneg %p103
      %p153 = pneg %p100
      %p154 = scmp.lt.s32.totalorder %s14, 1
      %s155 = scalar_select %p154, %s14, 1
      %s156 = smul.addr %s155, 8
      %s157 = scalar_lea.vmem %s3, %s156
      %p158 = scmp.lt.s32.totalorder %s14, 1
      %s159 = scalar_select %p158, %s14, 1
      %s160 = smul.addr %s159, 8
      %s161 = scalar_lea.vmem %s0, %s160
      %p162 = scmp.lt.s32.totalorder %s14, 1
      %s163 = scalar_select %p162, %s14, 1
      %s164 = smul.addr %s163, 8
      %s165 = scalar_lea.vmem %s3, %s164
      %v166 = vld [vmem:[%s161] sm:$0xff]
      %v167 = vld [vmem:[%s1] sm:$0xff]
      %v168 = vld [vmem:[%s1 + $0x8] sm:$0xf]
      %v169 = vld [vmem:[%s2] sm:$0x1]
      %v171 = vperm.slane %v169, 0
      %vm173 = vcmask 97280
      %v175 = vsel %vm173, %v166, 0
      %vm177 = vcmask 1043456
      %v179 = vsel %vm177, %v168, 0
      %181 = vmatpush.msra.mxu0 0.0
      %182 = vmatpush.msra.mxu0 0.0
      %183 = vmatpush.msra.mxu0 0.0
      %184 = vmatpush.msra.mxu0 0.0
      %185 = vmatpush.msra.mxu0 0.0
      %186 = vmatpush.msra.mxu0 0.0
      %187 = vmatpush.msra.mxu0 0.0
      %188 = vmatpush.msra.mxu0 0.0
      %189 = vmatpush.msra.mxu0 0.0
      %190 = vmatpush.msra.mxu0 0.0
      %191 = vmatpush.msra.mxu0 0.0
      %192 = vmatpush.msra.mxu0 0.0
      %193 = vmatpush.msra.mxu0 0.0
      %194 = vmatpush.msra.mxu0 0.0
      %195 = vmatpush.msra.mxu0 %v179
      %196 = vmatpush.msra.mxu0 %v167
      %197 = vmatmul.f32.gmra.mxu0 %v175
      %v198 = vpop.f32.mrf.mxu0
      %v199 = vadd.f32 %v171, %v198
      %200 = vdwg.mxu0
      %201 = vst [vmem:[%s165] sm:$0xff] %v199
      %p202 = scmp.lt.s32.totalorder %s14, 1
      %s203 = scalar_select %p202, %s14, 1
      %s204 = smul.addr %s203, 8
      %s205 = scalar_lea.vmem %s3, %s204
      // Predicated region
      $region33: #{token_embedding.1} parent=31 // pred_check
        %p206 = pneg %p100
      $region34: #{token_embedding.1} parent=31 // pred_check_branch
        %208 = sbr.rel (%p206) target = $region36
      $region35: #{token_embedding.1} parent=31 // pred_region
        _
      $region36: #{token_embedding.1} parent=31 // pred_fallthru
        _
    $region32: #{token_embedding.1} parent=5 // pred_fallthru
      _
    %p209 = scmp.le.s32.totalorder 2, %s9
    // Predicated region
    $region37: #{token_embedding.1} parent=5 // pred_check
      %p210 = pneg %p209
    $region38: #{token_embedding.1} parent=5 // pred_check_branch
      %212 = sbr.rel (%p210) target = $region40
    $region39: #{token_embedding.1} parent=5 // pred_region
      %s213 = ssub.s32 %s9, 2
      // Predicated region
      $region41: #{token_embedding.1} parent=39 // pred_check
        %p214 = pneg %p106
      $region42: #{token_embedding.1} parent=39 // pred_check_branch
        %216 = sbr.rel (%p214) target = $region44
      $region43: #{token_embedding.1} parent=39 // pred_region
        %p217 = scmp.lt.s32.totalorder %s15, 1
        %s218 = scalar_select %p217, %s15, 1
        %s219 = smul.addr %s218, 8
        %s220 = scalar_lea.vmem %s3, %s219
      $region44: #{token_embedding.1} parent=39 // pred_fallthru
        _
    $region40: #{token_embedding.1} parent=5 // pred_fallthru
      _
  $region6: #{token_embedding.1} parent=0 // loop_footer
    %s13 = sadd.s32 1, %s9
  $region7: #{token_embedding.1} parent=0 // loop_footer_branch
    %8 = sbr.rel target = $region3
  $region8: #{token_embedding.1} parent=0 // loop_exit
    _

</llo_original>
